<compile_context>
chip_gen: v7x
topology: tpu7x:2x2x1
jax: 0.10.0
libtpu: 0.0.40
codegen_flags: <defaults>
</compile_context>

<pallas_src>
import functools

import jax
import jax.numpy as jnp
from jax import lax
from jax.experimental import pallas as pl
from jax.experimental.pallas import tpu as pltpu

LANE = 128      # lane width
ROWS_SUB = 8    # sublane rows per strip-mined sub-chunk (1 f32 vreg per slab)


def _round_up(x, m):
    return ((x + m - 1) // m) * m


def _focal_loss_kernel(src_ref, lbl_ref, alpha_ref, out_ref, *,
                       gamma, soft_max, num_classes, rows_blk, rows_sub,
                       total_rows, last_full_blocks, k_inner, need_ragged):
    """One (batch b, spatial-outer so, spatial-inner ki) grid step.

    src_ref   : (1, C, rows_blk, 128) logits block (native dtype)
    lbl_ref   : (1, rows_blk, 128)    int32 labels block
    alpha_ref : (C, 8, 128)           per-class alpha, pre-broadcast over a sub-chunk
    out_ref   : (1, 1, rows_blk, 128) resident per-lane loss accumulator for (b, so)
    """
    so = pl.program_id(1)
    ki = pl.program_id(2)
    rb = so * k_inner + ki                      # logical row-block index (unclamped)

    @pl.when(ki == 0)
    def _():
        out_ref[...] = jnp.zeros_like(out_ref)

    n_sub = rows_blk // rows_sub
    unroll = max(1, min(4, n_sub))
    # Loaded once per grid step, kept in vregs across the sub-chunk loop (no
    # per-iteration broadcast_in_dim of alpha).
    alpha_planes = alpha_ref[...].astype(jnp.float32)      # (C, rows_sub, 128)

    def chunk_body(i, carry):
        r0 = pl.multiple_of(i * rows_sub, rows_sub)
        lbl = lbl_ref[0, pl.ds(r0, rows_sub), :]           # (rows_sub, 128) int32

        # Pass 1: running max over the (small) class axis -> (rows_sub, 128).
        m = src_ref[0, 0, pl.ds(r0, rows_sub), :].astype(jnp.float32)
        for c in range(1, num_classes):
            m = jnp.maximum(m, src_ref[0, c, pl.ds(r0, rows_sub), :].astype(jnp.float32))

        # Pass 2: exp / label selects, all dense (rows_sub, 128) VPU/EUP work.
        zeros = jnp.zeros_like(m)
        e_sum = zeros
        x_t = zeros
        a_t = zeros
        e_t = zeros
        for c in range(num_classes):
            x_c = src_ref[0, c, pl.ds(r0, rows_sub), :].astype(jnp.float32)
            e_c = jnp.exp(x_c - m)
            e_sum = e_sum + e_c
            is_c = lbl == c
            x_t = jnp.where(is_c, x_c, x_t)
            a_t = jnp.where(is_c, alpha_planes[c], a_t)
            if soft_max:
                e_t = jnp.where(is_c, e_c, e_t)

        log_p = (x_t - m) - jnp.log(e_sum)                 # log_softmax(x)[i, t_i]
        if soft_max:
            # Reuse exp(x - m); EUP approx reciprocal instead of a second exp.
            p_t = e_t * pl.reciprocal(e_sum, approx=True)  # P[i, t_i]
        else:
            p_t = x_t                                      # P = inputs

        # probs = F.nll_loss(P, t) = -P[i, t_i]  =>  1 - probs = 1 + p_t.
        base = 1.0 + p_t
        if gamma == 2.0:
            focal = base * base                            # pure VPU
        elif gamma == 1.0:
            focal = base
        elif gamma == 0.0:
            focal = jnp.ones_like(base)
        else:
            focal = base ** gamma

        loss = (-a_t) * focal * log_p                      # (rows_sub, 128)
        out_ref[0, 0, pl.ds(r0, rows_sub), :] += loss
        return carry

    if not need_ragged:
        # Static fast path: every block of every grid step is fully in bounds.
        lax.fori_loop(0, n_sub, chunk_body, 0, unroll=unroll)
    else:
        @pl.when(rb < last_full_blocks)
        def _():
            lax.fori_loop(0, n_sub, chunk_body, 0, unroll=unroll)

        @pl.when(rb >= last_full_blocks)
        def _():
            # Ragged / overrun block: only walk the in-bounds sub-chunks.  Rows that
            # were HBM-padded (label = -1) contribute exactly 0, OOB rows are never
            # read or accumulated, so no per-element masking is needed anywhere.
            n_valid = jnp.minimum(
                jnp.maximum(total_rows - rb * rows_blk, 0) // rows_sub, n_sub)
            lax.fori_loop(0, n_valid, chunk_body, 0)


def _focal_partial_sums(source, labels, alpha, *, gamma, soft_max, tile_lanes):
    """source: (B, C, S) logits; labels: (B, S) int32; alpha: (C,) f32.

    Returns (B, so_count, rows_blk, 128) lane-dense per-lane partial loss sums.
    """
    B, C, S = source.shape
    itemsize = jnp.dtype(source.dtype).itemsize

    # --- pack the spatial axis onto (rows, 128); pad (logits=0, label=-1) only if
    # --- S is not already a multiple of 128 * ROWS_SUB.  Padded positions match no
    # --- class, so alpha_t = 0 and their loss is exactly 0.
    align = LANE * ROWS_SUB
    S_pad = _round_up(max(S, 1), align)
    if S_pad != S:
        source = jnp.pad(source, ((0, 0), (0, 0), (0, S_pad - S)))
        labels = jnp.pad(labels, ((0, 0), (0, S_pad - S)), constant_values=-1)
    R = S_pad // LANE
    src_r = source.reshape(B, C, R, LANE)
    lbl_r = labels.reshape(B, R, LANE)
    alpha_planes = jnp.broadcast_to(
        alpha.astype(jnp.float32).reshape(C, 1, 1), (C, ROWS_SUB, LANE))

    # --- >= 2 parallel grid blocks so both v7x TensorCores are used even at B == 1.
    so_count = 2 if (B % 2 == 1 and R >= 2 * ROWS_SUB) else 1

    # --- generation-aware tile / VMEM budget (v5e/v6e: 128 MiB, v7x: 64 MiB).
    try:
        info = pltpu.get_tpu_info()
        vmem_cap = int(getattr(info, "vmem_capacity_bytes", 64 * 1024 * 1024))
    except Exception:
        vmem_cap = 64 * 1024 * 1024
    budget = min(int(vmem_cap * 0.55), 96 * 1024 * 1024)
    headroom = 2 * 1024 * 1024      # in-kernel temporaries (strip-mined) + misc scratch
    per_row = LANE * (2 * C * itemsize + 2 * 4 + 2 * 4)   # dbl-buffered src + lbl + out
    rows_vmem = max(ROWS_SUB, (budget - headroom) // per_row)
    rows_cap = _round_up(pl.cdiv(R, so_count), ROWS_SUB)  # never exceed the data
    rows_blk = max(ROWS_SUB, tile_lanes // LANE)
    rows_blk = min(rows_blk, rows_vmem, rows_cap)
    rows_blk = max(ROWS_SUB, (rows_blk // ROWS_SUB) * ROWS_SUB)

    total_blocks = pl.cdiv(R, rows_blk)
    k_inner = pl.cdiv(total_blocks, so_count)
    last_full = R // rows_blk
    need_ragged = (R % rows_blk != 0) or (so_count * k_inner != total_blocks)

    vmem_limit = int(min(budget,
                         max(16 * 1024 * 1024,
                             int(1.25 * (per_row * rows_blk + headroom)))))

    kernel = functools.partial(
        _focal_loss_kernel, gamma=float(gamma), soft_max=bool(soft_max),
        num_classes=C, rows_blk=rows_blk, rows_sub=ROWS_SUB, total_rows=R,
        last_full_blocks=last_full, k_inner=k_inner, need_ragged=need_ragged)

    # Overrun blocks (from the so split) are clamped to the last valid block; the
    # kernel never reads them (n_valid == 0), so the clamp is purely to keep the
    # auto-DMA in bounds.
    def src_map(b, so, ki):
        return (b, 0, jnp.minimum(so * k_inner + ki, total_blocks - 1), 0)

    def lbl_map(b, so, ki):
        return (b, jnp.minimum(so * k_inner + ki, total_blocks - 1), 0)

    out = pl.pallas_call(
        kernel,
        out_shape=jax.ShapeDtypeStruct((B, so_count, rows_blk, LANE), jnp.float32),
        grid_spec=pltpu.PrefetchScalarGridSpec(
            num_scalar_prefetch=0,
            grid=(B, so_count, k_inner),
            in_specs=[
                pl.BlockSpec((1, C, rows_blk, LANE), src_map),
                pl.BlockSpec((1, rows_blk, LANE), lbl_map),
                pl.BlockSpec((C, ROWS_SUB, LANE), lambda b, so, ki: (0, 0, 0)),
            ],
            out_specs=pl.BlockSpec((1, 1, rows_blk, LANE),
                                   lambda b, so, ki: (b, so, 0, 0)),
        ),
        compiler_params=pltpu.CompilerParams(
            dimension_semantics=("parallel", "parallel", "arbitrary"),
            vmem_limit_bytes=vmem_limit),
    )(src_r, lbl_r, alpha_planes)
    return out


@functools.partial(jax.jit,
                   static_argnames=("gamma", "size_average", "soft_max", "tile_lanes"))
def focal_loss(inputs, targets, alpha=None, gamma=2.0, size_average=True,
               soft_max=True, tile_lanes=131072):
    """Forward pass of FocalLoss matching the PyTorch reference."""
    if inputs.ndim > 2 and targets.ndim > 1:
        B, C = inputs.shape[0], inputs.shape[1]
        source = inputs.reshape(B, C, -1)                  # (B, C, S), pure reshape
        labels = targets.reshape(B, -1).astype(jnp.int32)  # (B, S)
    else:
        # 2-D path of the reference: inputs (N, C), targets (N,).
        C = inputs.shape[-1]
        # TODO(synk): add a channels-last kernel variant so large (N, C)
        # classification inputs do not pay this materialized HBM transpose.
        source = jnp.swapaxes(inputs, 0, 1)[None]          # (1, C, N)
        labels = targets.reshape(1, -1).astype(jnp.int32)

    if alpha is None:
        alpha = jnp.ones((C,), jnp.float32)
    alpha = jnp.asarray(alpha, jnp.float32).reshape(-1)

    n_elems = source.shape[0] * source.shape[2]            # pre-padding element count
    partial = _focal_partial_sums(source, labels, alpha, gamma=gamma,
                                  soft_max=soft_max, tile_lanes=tile_lanes)
    total = jnp.sum(partial)
    if size_average:
        return total / jnp.float32(n_elems)
    return total


def _focal_loss_ref(inputs, targets, alpha, gamma, size_average, soft_max):
    """Pure-JAX reference mirroring the PyTorch module line-by-line."""
    C = inputs.shape[1] if inputs.ndim > 2 else inputs.shape[-1]
    x = jnp.moveaxis(inputs, 1, -1).reshape(-1, C).astype(jnp.float32) \
        if inputs.ndim > 2 else inputs.reshape(-1, C).astype(jnp.float32)
    t = targets.reshape(-1).astype(jnp.int32)
    log_p = jnp.take_along_axis(jax.nn.log_softmax(x, axis=1), t[:, None], 1)[:, 0]
    P = jax.nn.softmax(x, axis=1) if soft_max else x
    p_t = jnp.take_along_axis(P, t[:, None], 1)[:, 0]
    a_t = jnp.asarray(alpha, jnp.float32)[t]
    probs = -p_t                                           # F.nll_loss sign, as in the module
    bl = -a_t * (1.0 - probs) ** gamma * log_p
    return bl.mean() if size_average else bl.sum()


def _check(got, want, tag, rtol=1e-3):
    got, want = float(got), float(want)
    assert abs(got - want) <= rtol * max(1.0, abs(want)), (tag, got, want)


if __name__ == "__main__":
    key = jax.random.PRNGKey(0)
    k1, k2, k3, k4, k5, k6 = jax.random.split(key, 6)

    # Case 1: B=2, C=4, spatial 8x16x8 (S=1024) — default config (mean, softmax).
    B, C, D, M, N = 2, 4, 8, 16, 8
    logits1 = jax.random.normal(k1, (B, C, D, M, N), dtype=jnp.float32)
    targets1 = jax.random.randint(k2, (B, D, M, N), 0, C, dtype=jnp.int32)
    loss1 = jax.block_until_ready(focal_loss(logits1, targets1))
    ref1 = _focal_loss_ref(logits1, targets1, jnp.ones((C,), jnp.float32), 2.0, True, True)
    assert loss1.shape == () and bool(jnp.isfinite(loss1))
    _check(loss1, ref1, "case1")

    # Case 2: B=1 (exercises the 2-way parallel spatial split for v7x), C=3,
    # spatial 8x16x24 (S=3072), small tile to exercise the ragged row-block path,
    # custom alpha, sum reduction.
    B2, C2 = 1, 3
    logits2 = jax.random.normal(k3, (B2, C2, 8, 16, 24), dtype=jnp.float32)
    targets2 = jax.random.randint(k4, (B2, 8, 16, 24), 0, C2, dtype=jnp.int32)
    alpha2 = jnp.array([0.25, 0.75, 1.0], jnp.float32)
    loss2 = jax.block_until_ready(
        focal_loss(logits2, targets2, alpha=alpha2, gamma=2.0,
                   size_average=False, soft_max=True, tile_lanes=2048))
    ref2 = _focal_loss_ref(logits2, targets2, alpha2, 2.0, False, True)
    _check(loss2, ref2, "case2")

    # Case 3: soft_max=False, spatial 4x8x10 (S=320, exercises the label=-1 padding path).
    B3, C3 = 2, 4
    logits3 = jax.random.normal(k5, (B3, C3, 4, 8, 10), dtype=jnp.float32)
    targets3 = jax.random.randint(k6, (B3, 4, 8, 10), 0, C3, dtype=jnp.int32)
    loss3 = jax.block_until_ready(
        focal_loss(logits3, targets3, gamma=2.0, size_average=True, soft_max=False))
    ref3 = _focal_loss_ref(logits3, targets3, jnp.ones((C3,), jnp.float32), 2.0, True, False)
    _check(loss3, ref3, "case3")

    print("KERNEL_OK")
</pallas_src>

<mosaic_0001>
module attributes {stable_mosaic.version = 11 : i64} {
  func.func @_focal_loss_kernel(%arg0: i32, %arg1: i32, %arg2: i32, %arg3: memref<1x4x8x128xf32, #tpu.memory_space<vmem>>, %arg4: memref<1x8x128xi32, #tpu.memory_space<vmem>>, %arg5: memref<4x8x128xf32, #tpu.memory_space<vmem>>, %arg6: memref<1x1x8x128xf32, #tpu.memory_space<vmem>>) attributes {dimension_semantics = [#tpu.dimension_semantics<parallel>, #tpu.dimension_semantics<parallel>, #tpu.dimension_semantics<arbitrary>], iteration_bounds = array<i64: 2, 1, 1>, scalar_prefetch = 0 : i64, scratch_operands = 0 : i64, tpu.core_type = #tpu.core_type<tc>, window_params = [{transform_indices = @transform_0, window_bounds = array<i64: 1, 4, 8, 128>}, {transform_indices = @transform_1, window_bounds = array<i64: 1, 8, 128>}, {pipeline_mode = #tpu.pipeline_mode<synchronous>, transform_indices = @transform_2, window_bounds = array<i64: 4, 8, 128>}, {transform_indices = @transform_3, window_bounds = array<i64: 1, 1, 8, 128>}]} {
    %c0_i32 = arith.constant 0 : i32
    %0 = arith.cmpi eq, %arg2, %c0_i32 : i32
    %1 = arith.extui %0 : i1 to i32
    %c0_i32_0 = arith.constant 0 : i32
    %2 = arith.cmpi ne, %1, %c0_i32_0 : i32
    scf.if %2 {
      %cst_37 = arith.constant 0.000000e+00 : f32
      %97 = vector.broadcast %cst_37 : f32 to vector<1x1x8x128xf32>
      %c0_38 = arith.constant 0 : index
      %c0_39 = arith.constant 0 : index
      %c0_40 = arith.constant 0 : index
      %c0_41 = arith.constant 0 : index
      %98 = vector.load %arg6[%c0_38, %c0_39, %c0_40, %c0_41] : memref<1x1x8x128xf32, #tpu.memory_space<vmem>>, vector<1x1x8x128xf32>
      tpu.vector_store %arg6[%c0_38, %c0_39, %c0_40, %c0_41], %97 {strides = array<i32>} : memref<1x1x8x128xf32, #tpu.memory_space<vmem>>, vector<1x1x8x128xf32>,
    } else {
    }
    %c0 = arith.constant 0 : index
    %c0_1 = arith.constant 0 : index
    %c0_2 = arith.constant 0 : index
    %3 = vector.load %arg5[%c0, %c0_1, %c0_2] : memref<4x8x128xf32, #tpu.memory_space<vmem>>, vector<4x8x128xf32>
    %c0_i32_3 = arith.constant 0 : i32
    %c8_i32 = arith.constant 8 : i32
    %4 = arith.muli %c0_i32_3, %c8_i32 : i32
    %5 = tpu.assume_multiple %4, 8 : i32
    %c0_4 = arith.constant 0 : index
    %6 = arith.index_cast %5 : i32 to index
    %c0_5 = arith.constant 0 : index
    %7 = vector.load %arg4[%c0_4, %6, %c0_5] : memref<1x8x128xi32, #tpu.memory_space<vmem>>, vector<1x8x128xi32>
    %8 = vector.shape_cast %7 : vector<1x8x128xi32> to vector<8x128xi32>
    %c0_6 = arith.constant 0 : index
    %c0_7 = arith.constant 0 : index
    %9 = arith.index_cast %5 : i32 to index
    %c0_8 = arith.constant 0 : index
    %10 = vector.load %arg3[%c0_6, %c0_7, %9, %c0_8] : memref<1x4x8x128xf32, #tpu.memory_space<vmem>>, vector<1x1x8x128xf32>
    %11 = vector.shape_cast %10 : vector<1x1x8x128xf32> to vector<8x128xf32>
    %c0_9 = arith.constant 0 : index
    %c1 = arith.constant 1 : index
    %12 = arith.index_cast %5 : i32 to index
    %c0_10 = arith.constant 0 : index
    %13 = vector.load %arg3[%c0_9, %c1, %12, %c0_10] : memref<1x4x8x128xf32, #tpu.memory_space<vmem>>, vector<1x1x8x128xf32>
    %14 = vector.shape_cast %13 : vector<1x1x8x128xf32> to vector<8x128xf32>
    %15 = arith.maximumf %11, %14 : vector<8x128xf32>
    %c0_11 = arith.constant 0 : index
    %c2 = arith.constant 2 : index
    %16 = arith.index_cast %5 : i32 to index
    %c0_12 = arith.constant 0 : index
    %17 = vector.load %arg3[%c0_11, %c2, %16, %c0_12] : memref<1x4x8x128xf32, #tpu.memory_space<vmem>>, vector<1x1x8x128xf32>
    %18 = vector.shape_cast %17 : vector<1x1x8x128xf32> to vector<8x128xf32>
    %19 = arith.maximumf %15, %18 : vector<8x128xf32>
    %c0_13 = arith.constant 0 : index
    %c3 = arith.constant 3 : index
    %20 = arith.index_cast %5 : i32 to index
    %c0_14 = arith.constant 0 : index
    %21 = vector.load %arg3[%c0_13, %c3, %20, %c0_14] : memref<1x4x8x128xf32, #tpu.memory_space<vmem>>, vector<1x1x8x128xf32>
    %22 = vector.shape_cast %21 : vector<1x1x8x128xf32> to vector<8x128xf32>
    %23 = arith.maximumf %19, %22 : vector<8x128xf32>
    %cst = arith.constant 0.000000e+00 : f32
    %24 = vector.broadcast %cst : f32 to vector<8x128xf32>
    %c0_15 = arith.constant 0 : index
    %c0_16 = arith.constant 0 : index
    %25 = arith.index_cast %5 : i32 to index
    %c0_17 = arith.constant 0 : index
    %26 = vector.load %arg3[%c0_15, %c0_16, %25, %c0_17] : memref<1x4x8x128xf32, #tpu.memory_space<vmem>>, vector<1x1x8x128xf32>
    %27 = vector.shape_cast %26 : vector<1x1x8x128xf32> to vector<8x128xf32>
    %28 = arith.subf %27, %23 : vector<8x128xf32>
    %29 = math.exp %28 : vector<8x128xf32>
    %30 = arith.addf %24, %29 : vector<8x128xf32>
    %c0_i32_18 = arith.constant 0 : i32
    %31 = vector.broadcast %c0_i32_18 : i32 to vector<8x128xi32>
    %32 = arith.cmpi eq, %8, %31 : vector<8x128xi32>
    %33 = arith.select %32, %27, %24 : vector<8x128xi1>, vector<8x128xf32>
    %34 = vector.extract_strided_slice %3 {offsets = [0, 0, 0], sizes = [1, 8, 128], strides = [1, 1, 1]} : vector<4x8x128xf32> to vector<1x8x128xf32>
    %35 = vector.shape_cast %34 : vector<1x8x128xf32> to vector<8x128xf32>
    %36 = arith.select %32, %35, %24 : vector<8x128xi1>, vector<8x128xf32>
    %37 = arith.select %32, %29, %24 : vector<8x128xi1>, vector<8x128xf32>
    %c0_19 = arith.constant 0 : index
    %c1_20 = arith.constant 1 : index
    %38 = arith.index_cast %5 : i32 to index
    %c0_21 = arith.constant 0 : index
    %39 = vector.load %arg3[%c0_19, %c1_20, %38, %c0_21] : memref<1x4x8x128xf32, #tpu.memory_space<vmem>>, vector<1x1x8x128xf32>
    %40 = vector.shape_cast %39 : vector<1x1x8x128xf32> to vector<8x128xf32>
    %41 = arith.subf %40, %23 : vector<8x128xf32>
    %42 = math.exp %41 : vector<8x128xf32>
    %43 = arith.addf %30, %42 : vector<8x128xf32>
    %c1_i32 = arith.constant 1 : i32
    %44 = vector.broadcast %c1_i32 : i32 to vector<8x128xi32>
    %45 = arith.cmpi eq, %8, %44 : vector<8x128xi32>
    %46 = arith.select %45, %40, %33 : vector<8x128xi1>, vector<8x128xf32>
    %47 = vector.extract_strided_slice %3 {offsets = [1, 0, 0], sizes = [1, 8, 128], strides = [1, 1, 1]} : vector<4x8x128xf32> to vector<1x8x128xf32>
    %48 = vector.shape_cast %47 : vector<1x8x128xf32> to vector<8x128xf32>
    %49 = arith.select %45, %48, %36 : vector<8x128xi1>, vector<8x128xf32>
    %50 = arith.select %45, %42, %37 : vector<8x128xi1>, vector<8x128xf32>
    %c0_22 = arith.constant 0 : index
    %c2_23 = arith.constant 2 : index
    %51 = arith.index_cast %5 : i32 to index
    %c0_24 = arith.constant 0 : index
    %52 = vector.load %arg3[%c0_22, %c2_23, %51, %c0_24] : memref<1x4x8x128xf32, #tpu.memory_space<vmem>>, vector<1x1x8x128xf32>
    %53 = vector.shape_cast %52 : vector<1x1x8x128xf32> to vector<8x128xf32>
    %54 = arith.subf %53, %23 : vector<8x128xf32>
    %55 = math.exp %54 : vector<8x128xf32>
    %56 = arith.addf %43, %55 : vector<8x128xf32>
    %c2_i32 = arith.constant 2 : i32
    %57 = vector.broadcast %c2_i32 : i32 to vector<8x128xi32>
    %58 = arith.cmpi eq, %8, %57 : vector<8x128xi32>
    %59 = arith.select %58, %53, %46 : vector<8x128xi1>, vector<8x128xf32>
    %60 = vector.extract_strided_slice %3 {offsets = [2, 0, 0], sizes = [1, 8, 128], strides = [1, 1, 1]} : vector<4x8x128xf32> to vector<1x8x128xf32>
    %61 = vector.shape_cast %60 : vector<1x8x128xf32> to vector<8x128xf32>
    %62 = arith.select %58, %61, %49 : vector<8x128xi1>, vector<8x128xf32>
    %63 = arith.select %58, %55, %50 : vector<8x128xi1>, vector<8x128xf32>
    %c0_25 = arith.constant 0 : index
    %c3_26 = arith.constant 3 : index
    %64 = arith.index_cast %5 : i32 to index
    %c0_27 = arith.constant 0 : index
    %65 = vector.load %arg3[%c0_25, %c3_26, %64, %c0_27] : memref<1x4x8x128xf32, #tpu.memory_space<vmem>>, vector<1x1x8x128xf32>
    %66 = vector.shape_cast %65 : vector<1x1x8x128xf32> to vector<8x128xf32>
    %67 = arith.subf %66, %23 : vector<8x128xf32>
    %68 = math.exp %67 : vector<8x128xf32>
    %69 = arith.addf %56, %68 : vector<8x128xf32>
    %c3_i32 = arith.constant 3 : i32
    %70 = vector.broadcast %c3_i32 : i32 to vector<8x128xi32>
    %71 = arith.cmpi eq, %8, %70 : vector<8x128xi32>
    %72 = arith.select %71, %66, %59 : vector<8x128xi1>, vector<8x128xf32>
    %73 = vector.extract_strided_slice %3 {offsets = [3, 0, 0], sizes = [1, 8, 128], strides = [1, 1, 1]} : vector<4x8x128xf32> to vector<1x8x128xf32>
    %74 = vector.shape_cast %73 : vector<1x8x128xf32> to vector<8x128xf32>
    %75 = arith.select %71, %74, %62 : vector<8x128xi1>, vector<8x128xf32>
    %76 = arith.select %71, %68, %63 : vector<8x128xi1>, vector<8x128xf32>
    %77 = arith.subf %72, %23 : vector<8x128xf32>
    %78 = math.log %69 : vector<8x128xf32>
    %79 = arith.subf %77, %78 : vector<8x128xf32>
    %80 = tpu.reciprocal %69 {approx = true} : vector<8x128xf32> -> vector<8x128xf32>
    %81 = arith.mulf %76, %80 : vector<8x128xf32>
    %cst_28 = arith.constant 1.000000e+00 : f32
    %82 = vector.broadcast %cst_28 : f32 to vector<8x128xf32>
    %83 = arith.addf %82, %81 : vector<8x128xf32>
    %84 = arith.mulf %83, %83 : vector<8x128xf32>
    %cst_29 = arith.constant 0.000000e+00 : f32
    %85 = vector.broadcast %cst_29 : f32 to vector<8x128xf32>
    %86 = arith.subf %85, %75 : vector<8x128xf32>
    %87 = arith.mulf %86, %84 : vector<8x128xf32>
    %88 = arith.mulf %87, %79 : vector<8x128xf32>
    %c0_30 = arith.constant 0 : index
    %c0_31 = arith.constant 0 : index
    %89 = arith.index_cast %5 : i32 to index
    %c0_32 = arith.constant 0 : index
    %90 = vector.load %arg6[%c0_30, %c0_31, %89, %c0_32] : memref<1x1x8x128xf32, #tpu.memory_space<vmem>>, vector<1x1x8x128xf32>
    %91 = vector.shape_cast %90 : vector<1x1x8x128xf32> to vector<8x128xf32>
    %92 = arith.addf %91, %88 : vector<8x128xf32>
    %c0_33 = arith.constant 0 : index
    %c0_34 = arith.constant 0 : index
    %93 = arith.index_cast %5 : i32 to index
    %c0_35 = arith.constant 0 : index
    %94 = vector.load %arg6[%c0_33, %c0_34, %93, %c0_35] : memref<1x1x8x128xf32, #tpu.memory_space<vmem>>, vector<1x1x8x128xf32>
    %95 = vector.shape_cast %94 : vector<1x1x8x128xf32> to vector<8x128xf32>
    %96 = vector.shape_cast %92 : vector<8x128xf32> to vector<1x1x8x128xf32>
    tpu.vector_store %arg6[%c0_33, %c0_34, %93, %c0_35], %96 {strides = array<i32>} : memref<1x1x8x128xf32, #tpu.memory_space<vmem>>, vector<1x1x8x128xf32>,
    %c1_i32_36 = arith.constant 1 : i32
    return
  }
  func.func @transform_0(%arg0: i32, %arg1: i32, %arg2: i32) -> (i32, i32, i32, i32) {
    %c1_i32 = arith.constant 1 : i32
    %0 = arith.muli %arg1, %c1_i32 : i32
    %1 = arith.addi %0, %arg2 : i32
    %c0_i32 = arith.constant 0 : i32
    %2 = arith.minsi %1, %c0_i32 : i32
    %c0_i32_0 = arith.constant 0 : i32
    %c0_i32_1 = arith.constant 0 : i32
    %c0_i32_2 = arith.constant 0 : i32
    return %arg0, %c0_i32_0, %2, %c0_i32_1 : i32, i32, i32, i32
  }
  func.func @transform_1(%arg0: i32, %arg1: i32, %arg2: i32) -> (i32, i32, i32) {
    %c1_i32 = arith.constant 1 : i32
    %0 = arith.muli %arg1, %c1_i32 : i32
    %1 = arith.addi %0, %arg2 : i32
    %c0_i32 = arith.constant 0 : i32
    %2 = arith.minsi %1, %c0_i32 : i32
    %c0_i32_0 = arith.constant 0 : i32
    %c0_i32_1 = arith.constant 0 : i32
    return %arg0, %2, %c0_i32_0 : i32, i32, i32
  }
  func.func @transform_2(%arg0: i32, %arg1: i32, %arg2: i32) -> (i32, i32, i32) {
    %c0_i32 = arith.constant 0 : i32
    %c0_i32_0 = arith.constant 0 : i32
    %c0_i32_1 = arith.constant 0 : i32
    %c0_i32_2 = arith.constant 0 : i32
    return %c0_i32, %c0_i32_0, %c0_i32_1 : i32, i32, i32
  }
  func.func @transform_3(%arg0: i32, %arg1: i32, %arg2: i32) -> (i32, i32, i32, i32) {
    %c0_i32 = arith.constant 0 : i32
    %c0_i32_0 = arith.constant 0 : i32
    %c0_i32_1 = arith.constant 0 : i32
    return %arg0, %arg1, %c0_i32, %c0_i32_0 : i32, i32, i32, i32
  }
}

</mosaic_0001>

<llo_original>
// kernel: focal_loss.1
$region0: #{focal_loss.1}
  #allocation0 [shape = 'u32[]', space=smem, size = 0x4, offset = 0x4, fixed_abs, tag = 'smem constant byte address 0x4 - core index']
  #allocation1 [shape = 'u32[144,128]{1,0:T(1,128)}', space=vmem, size = 0x12000, scoped, tag = 'internal scratch']
  %s0 = inlined_call_operand.vmem [shape: f32[2,4,8,128], index: 0, kind: input, shape index: {}]
  %s1 = inlined_call_operand.vmem [shape: s32[2,8,128], index: 1, kind: input, shape index: {}]
  %s2 = inlined_call_operand.vmem [shape: f32[4,8,128], index: 2, kind: input, shape index: {}]
  %s3 = inlined_call_operand.vmem [shape: f32[2,1,8,128], index: 3, kind: output, shape index: {}]
  %s4 = sld [smem:[#allocation0]]
  $region49: #{focal_loss.1} parent=0
    _
  %s6 = ssub.s32 1, %s4
  %s7 = scalar_select 0, %s6, %s4
  loop: start=0, step=1, limit=4
  $region2: #{focal_loss.1} parent=0 // loop_pre_header
    _
  $region3: #{focal_loss.1} parent=0 // loop_header
    %s9 = sphi 0, %s13
    %p10 = scmp.ge.s32.totalorder %s9, 4
    %s16 = sphi 0, %s35
    %s17 = sphi 0, %s31
    %s18 = sphi 0, %s27
    %s19 = sphi 0, %s16
    %s20 = sphi 0, %s17
    %s21 = sphi 0, %s18
    %s22 = sphi 0, %s19
    %s23 = sphi 0, %s20
    %s24 = sphi 0, %s21
    %s46 = sphi 0, %s48
    %s49 = sphi 0, %s46
    %s50 = sphi 0, %s49
    %s66 = sphi 0, %s50
    %s80 = sphi 0, %s82
    %s83 = sphi 0, %s80
    %s84 = sphi 0, %s83
    %s100 = sphi 0, %s84
    %s104 = sphi 0, %s104
    %s106 = sphi 0, %s104
    %s107 = sphi 0, %s106
    %s121 = sphi 0, %s107
    %s129 = sphi 0, %s131
    %s132 = sphi 0, %s129
    %s133 = sphi 0, %s132
    %s149 = sphi 0, %s133
  $region4: #{focal_loss.1} parent=0 // loop_header_branch
    %12 = sbr.rel (%p10) target = $region8
  $region5: #{focal_loss.1} parent=0 // loop_body
    %s14 = ssub.s32 %s9, 1
    %s15 = ssub.s32 %s9, 2
    %s25 = sadd.s32 1, %s18
    %p26 = scmp.ge.s32.totalorder %s25, 1
    %s27 = scalar_select %p26, 0, %s25
    %s28 = sadd.s32 1, %s17
    %s29 = scalar_select %p26, %s28, %s17
    %p30 = scmp.ge.s32.totalorder %s29, 1
    %s31 = scalar_select %p30, 0, %s29
    %s32 = sadd.s32 1, %s16
    %s33 = scalar_select %p30, %s32, %s16
    %p34 = scmp.ge.s32.totalorder %s33, 2
    %s35 = scalar_select %p34, 0, %s33
    %s36 = sadd.s32 %s17, %s18
    %p37 = scmp.lt.s32.totalorder %s36, 0
    %s38 = scalar_select %p37, %s36, 0
    %s39 = sadd.s32 %s31, %s27
    %p40 = scmp.lt.s32.totalorder %s39, 0
    %s41 = scalar_select %p40, %s39, 0
    %s42 = ssub.s32 %s16, %s35
    %s43 = ssub.s32 %s38, %s41
    %s44 = sor.u32 %s42, %s43
    %p45 = scmp.eq.s32.totalorder %s44, 0
    %s47 = sadd.s32 %s46, 1
    %s48 = scalar_select %p45, %s46, %s47
    %p51 = pneg %p45
    %p52 = scmp.eq.s32.totalorder %s9, 1
    %p53 = por %p51, %p52
    %p54 = scmp.ne.s32.totalorder %s46, %s49
    %p55 = scmp.eq.s32.totalorder %s9, 0
    %p56 = por %p54, %p55
    %p57 = scmp.ne.s32.totalorder %s46, %s49
    %p58 = scmp.eq.s32.totalorder %s14, 1
    %p59 = por %p57, %p58
    %p60 = scmp.ne.s32.totalorder %s49, %s50
    %p61 = scmp.eq.s32.totalorder %s14, 0
    %p62 = por %p60, %p61
    %p63 = scmp.ne.s32.totalorder %s49, %s50
    %p64 = scmp.eq.s32.totalorder %s15, 1
    %p65 = por %p63, %p64
    %p67 = scmp.ne.s32.totalorder %s50, %s66
    %p68 = scmp.eq.s32.totalorder %s15, 0
    %p69 = por %p67, %p68
    %s70 = sadd.s32 %s17, %s18
    %p71 = scmp.lt.s32.totalorder %s70, 0
    %s72 = scalar_select %p71, %s70, 0
    %s73 = sadd.s32 %s31, %s27
    %p74 = scmp.lt.s32.totalorder %s73, 0
    %s75 = scalar_select %p74, %s73, 0
    %s76 = ssub.s32 %s16, %s35
    %s77 = ssub.s32 %s72, %s75
    %s78 = sor.u32 %s76, %s77
    %p79 = scmp.eq.s32.totalorder %s78, 0
    %s81 = sadd.s32 %s80, 1
    %s82 = scalar_select %p79, %s80, %s81
    %p85 = pneg %p79
    %p86 = scmp.eq.s32.totalorder %s9, 1
    %p87 = por %p85, %p86
    %p88 = scmp.ne.s32.totalorder %s80, %s83
    %p89 = scmp.eq.s32.totalorder %s9, 0
    %p90 = por %p88, %p89
    %p91 = scmp.ne.s32.totalorder %s80, %s83
    %p92 = scmp.eq.s32.totalorder %s14, 1
    %p93 = por %p91, %p92
    %p94 = scmp.ne.s32.totalorder %s83, %s84
    %p95 = scmp.eq.s32.totalorder %s14, 0
    %p96 = por %p94, %p95
    %p97 = scmp.ne.s32.totalorder %s83, %s84
    %p98 = scmp.eq.s32.totalorder %s15, 1
    %p99 = por %p97, %p98
    %p101 = scmp.ne.s32.totalorder %s84, %s100
    %p102 = scmp.eq.s32.totalorder %s15, 0
    %p103 = por %p101, %p102
    %s105 = sadd.s32 %s104, 1
    %p108 = scmp.eq.s32.totalorder %s9, 1
    %p109 = scmp.ne.s32.totalorder %s104, %s106
    %p110 = scmp.eq.s32.totalorder %s9, 0
    %p111 = por %p109, %p110
    %p112 = scmp.ne.s32.totalorder %s104, %s106
    %p113 = scmp.eq.s32.totalorder %s14, 1
    %p114 = por %p112, %p113
    %p115 = scmp.ne.s32.totalorder %s106, %s107
    %p116 = scmp.eq.s32.totalorder %s14, 0
    %p117 = por %p115, %p116
    %p118 = scmp.ne.s32.totalorder %s106, %s107
    %p119 = scmp.eq.s32.totalorder %s15, 1
    %p120 = por %p118, %p119
    %p122 = scmp.ne.s32.totalorder %s107, %s121
    %p123 = scmp.eq.s32.totalorder %s15, 0
    %p124 = por %p122, %p123
    %s125 = ssub.s32 %s16, %s35
    %s126 = ssub.s32 %s17, %s31
    %s127 = sor.u32 %s125, %s126
    %p128 = scmp.eq.s32.totalorder %s127, 0
    %s130 = sadd.s32 %s129, 1
    %s131 = scalar_select %p128, %s129, %s130
    %p134 = pneg %p128
    %p135 = scmp.eq.s32.totalorder %s9, 1
    %p136 = por %p134, %p135
    %p137 = scmp.ne.s32.totalorder %s129, %s132
    %p138 = scmp.eq.s32.totalorder %s9, 0
    %p139 = por %p137, %p138
    %p140 = scmp.ne.s32.totalorder %s129, %s132
    %p141 = scmp.eq.s32.totalorder %s14, 1
    %p142 = por %p140, %p141
    %p143 = scmp.ne.s32.totalorder %s132, %s133
    %p144 = scmp.eq.s32.totalorder %s14, 0
    %p145 = por %p143, %p144
    %p146 = scmp.ne.s32.totalorder %s132, %s133
    %p147 = scmp.eq.s32.totalorder %s15, 1
    %p148 = por %p146, %p147
    %p150 = scmp.ne.s32.totalorder %s133, %s149
    %p151 = scmp.eq.s32.totalorder %s15, 0
    %p152 = por %p150, %p151
    %p153 = scmp.le.s32.totalorder 1, %s9
    %p154 = scmp.lt.s32.totalorder %s9, 3
    %p155 = pnand %p153, %p154
    %p156 = pneg %p155
    // Predicated region
    $region9: #{focal_loss.1} parent=5 // pred_check
      _
    $region10: #{focal_loss.1} parent=5 // pred_check_branch
      %158 = sbr.rel (%p155) target = $region12
    $region11: #{focal_loss.1} parent=5 // pred_region
      %s159 = ssub.s32 %s9, 1
      // Predicated region
      $region13: #{focal_loss.1} parent=11 // pred_check
        %p160 = pneg %p117
      $region14: #{focal_loss.1} parent=11 // pred_check_branch
        %162 = sbr.rel (%p160) target = $region16
      $region15: #{focal_loss.1} parent=11 // pred_region
        _
      $region16: #{focal_loss.1} parent=11 // pred_fallthru
        _
    $region12: #{focal_loss.1} parent=5 // pred_fallthru
      _
    %p163 = scmp.lt.s32.totalorder %s9, 2
    // Predicated region
    $region17: #{focal_loss.1} parent=5 // pred_check
      %p164 = pneg %p163
    $region18: #{focal_loss.1} parent=5 // pred_check_branch
      %166 = sbr.rel (%p164) target = $region20
    $region19: #{focal_loss.1} parent=5 // pred_region
      // Predicated region
      $region21: #{focal_loss.1} parent=19 // pred_check
        %p167 = pneg %p56
      $region22: #{focal_loss.1} parent=19 // pred_check_branch
        %169 = sbr.rel (%p167) target = $region24
      $region23: #{focal_loss.1} parent=19 // pred_region
        %s170 = sadd.s32 %s17, %s18
        %p171 = scmp.lt.s32.totalorder %s170, 0
        %s172 = scalar_select %p171, %s170, 0
        %p173 = scmp.lt.s32.totalorder %s16, 1
        %s174 = scalar_select %p173, %s16, 1
        %p175 = scmp.lt.s32.totalorder %s172, 0
        %s176 = scalar_select %p175, %s172, 0
        %s177 = smul.addr %s174, 4
        %s178 = sadd.s32 %s176, %s177
        %s179 = smul.addr %s178, 8
        %s180 = scalar_lea.vmem %s0, %s179
        %s181 = sadd.s32 %s17, %s18
        %p182 = scmp.lt.s32.totalorder %s181, 0
        %s183 = scalar_select %p182, %s181, 0
      $region24: #{focal_loss.1} parent=19 // pred_fallthru
        _
      // Predicated region
      $region25: #{focal_loss.1} parent=19 // pred_check
        %p184 = pneg %p90
      $region26: #{focal_loss.1} parent=19 // pred_check_branch
        %186 = sbr.rel (%p184) target = $region28
      $region27: #{focal_loss.1} parent=19 // pred_region
        %s187 = sadd.s32 %s17, %s18
        %p188 = scmp.lt.s32.totalorder %s187, 0
        %s189 = scalar_select %p188, %s187, 0
        %p190 = scmp.lt.s32.totalorder %s16, 1
        %s191 = scalar_select %p190, %s16, 1
        %p192 = scmp.lt.s32.totalorder %s189, 0
        %s193 = scalar_select %p192, %s189, 0
        %s194 = sadd.s32 %s193, %s191
        %s195 = smul.addr %s194, 8
        %s196 = scalar_lea.vmem %s1, %s195
        %s197 = sadd.s32 %s17, %s18
        %p198 = scmp.lt.s32.totalorder %s197, 0
        %s199 = scalar_select %p198, %s197, 0
      $region28: #{focal_loss.1} parent=19 // pred_fallthru
        _
    $region20: #{focal_loss.1} parent=5 // pred_fallthru
      _
    %p200 = scmp.le.s32.totalorder 1, %s9
    %p201 = scmp.lt.s32.totalorder %s9, 3
    %p202 = pnand %p200, %p201
    %p203 = pneg %p202
    // Predicated region
    $region29: #{focal_loss.1} parent=5 // pred_check
      _
    $region30: #{focal_loss.1} parent=5 // pred_check_branch
      %205 = sbr.rel (%p202) target = $region32
    $region31: #{focal_loss.1} parent=5 // pred_region
      %s206 = ssub.s32 %s9, 1
      %s207 = sadd.s32 %s20, %s21
      %p208 = scmp.lt.s32.totalorder %s207, 0
      %s209 = scalar_select %p208, %s207, 0
      %p210 = scmp.lt.s32.totalorder %s19, 1
      %s211 = scalar_select %p210, %s19, 1
      %p212 = scmp.lt.s32.totalorder %s209, 0
      %s213 = scalar_select %p212, %s209, 0
      %s214 = smul.addr %s211, 4
      %s215 = sadd.s32 %s213, %s214
      %s216 = smul.addr %s215, 8
      %s217 = scalar_lea.vmem %s0, %s216
      %p218 = pneg %p62
      %p219 = pneg %p59
      %s220 = sadd.s32 %s20, %s21
      %p221 = scmp.lt.s32.totalorder %s220, 0
      %s222 = scalar_select %p221, %s220, 0
      %p223 = scmp.lt.s32.totalorder %s19, 1
      %s224 = scalar_select %p223, %s19, 1
      %p225 = scmp.lt.s32.totalorder %s222, 0
      %s226 = scalar_select %p225, %s222, 0
      %s227 = sadd.s32 %s226, %s224
      %s228 = smul.addr %s227, 8
      %s229 = scalar_lea.vmem %s1, %s228
      %p230 = pneg %p96
      %p231 = pneg %p93
      %p232 = pneg %p117
      %p233 = pneg %p114
      %p234 = pneg %p145
      %p235 = pneg %p142
      %p236 = scmp.lt.s32.totalorder %s19, 1
      %s237 = scalar_select %p236, %s19, 1
      %p238 = scmp.lt.s32.totalorder %s20, 0
      %s239 = scalar_select %p238, %s20, 0
      %s240 = sadd.s32 %s239, %s237
      %s241 = smul.addr %s240, 8
      %s242 = scalar_lea.vmem %s3, %s241
      %s243 = sadd.s32 %s20, %s21
      %p244 = scmp.lt.s32.totalorder %s243, 0
      %s245 = scalar_select %p244, %s243, 0
      %p246 = scmp.lt.s32.totalorder %s19, 1
      %s247 = scalar_select %p246, %s19, 1
      %p248 = scmp.lt.s32.totalorder %s245, 0
      %s249 = scalar_select %p248, %s245, 0
      %s250 = smul.addr %s247, 4
      %s251 = sadd.s32 %s249, %s250
      %s252 = smul.addr %s251, 8
      %s253 = scalar_lea.vmem %s0, %s252
      %s254 = sadd.s32 %s20, %s21
      %p255 = scmp.lt.s32.totalorder %s254, 0
      %s256 = scalar_select %p255, %s254, 0
      %s257 = sadd.s32 %s20, %s21
      %p258 = scmp.lt.s32.totalorder %s257, 0
      %s259 = scalar_select %p258, %s257, 0
      %p260 = scmp.lt.s32.totalorder %s19, 1
      %s261 = scalar_select %p260, %s19, 1
      %p262 = scmp.lt.s32.totalorder %s259, 0
      %s263 = scalar_select %p262, %s259, 0
      %s264 = sadd.s32 %s263, %s261
      %s265 = smul.addr %s264, 8
      %s266 = scalar_lea.vmem %s1, %s265
      %s267 = sadd.s32 %s20, %s21
      %p268 = scmp.lt.s32.totalorder %s267, 0
      %s269 = scalar_select %p268, %s267, 0
      %p270 = scmp.lt.s32.totalorder %s19, 1
      %s271 = scalar_select %p270, %s19, 1
      %p272 = scmp.lt.s32.totalorder %s20, 0
      %s273 = scalar_select %p272, %s20, 0
      %s274 = sadd.s32 %s273, %s271
      %s275 = smul.addr %s274, 8
      %s276 = scalar_lea.vmem %s3, %s275
      %p277 = scmp.eq.s32.totalorder %s21, 0
      // Predicated region
      $region33: #{focal_loss.1} parent=31 // pred_check
        %p278 = pneg %p277
      $region34: #{focal_loss.1} parent=31 // pred_check_branch
        %280 = sbr.rel (%p278) target = $region36
      $region35: #{focal_loss.1} parent=31 // pred_region
        %281 = vst [vmem:[%s276] sm:$0xff] 0.0
      $region36: #{focal_loss.1} parent=31 // pred_fallthru
        _
      %v282 = vld [vmem:[%s2] sm:$0xff]
      %v283 = vld [vmem:[%s2 + $0x8] sm:$0xff]
      %v284 = vld [vmem:[%s2 + $0x10] sm:$0xff]
      %v285 = vld [vmem:[%s2 + $0x18] sm:$0xff]
      %v286 = vld [vmem:[%s266] sm:$0xff]
      %v287 = vld [vmem:[%s253] sm:$0xff]
      %s288 = sadd.s32 0, 8
      %s289 = scalar_lea.vmem %s253, %s288
      %v290 = vld [vmem:[%s289] sm:$0xff]
      %v291 = vmax.f32 %v287, %v290
      %s292 = sadd.s32 0, 16
      %s293 = scalar_lea.vmem %s253, %s292
      %v294 = vld [vmem:[%s293] sm:$0xff]
      %v295 = vmax.f32 %v291, %v294
      %s296 = sadd.s32 0, 24
      %s297 = scalar_lea.vmem %s253, %s296
      %v298 = vld [vmem:[%s297] sm:$0xff]
      %v299 = vmax.f32 %v295, %v298
      %v300 = vsub.f32 %v287, %v299
      %v301 = vmul.f32 %v300, 1.442695
      %v302 = vpow.pop %v301
      %v303 = vadd.f32 %v302, 0.0
      %vm304 = vcmp.eq.s32.totalorder %v286, 0
      %v305 = vsel %vm304, %v287, 0.0
      %v306 = vsel %vm304, %v282, 0.0
      %v307 = vsel %vm304, %v302, 0.0
      %v308 = vsub.f32 %v290, %v299
      %v309 = vmul.f32 %v308, 1.442695
      %v310 = vpow.pop %v309
      %v311 = vadd.f32 %v303, %v310
      %vm312 = vcmp.eq.s32.totalorder %v286, 1
      %v313 = vsel %vm312, %v290, %v305
      %v314 = vsel %vm312, %v283, %v306
      %v315 = vsel %vm312, %v310, %v307
      %v316 = vsub.f32 %v294, %v299
      %v317 = vmul.f32 %v316, 1.442695
      %v318 = vpow.pop %v317
      %v319 = vadd.f32 %v311, %v318
      %vm320 = vcmp.eq.s32.totalorder %v286, 2
      %v321 = vsel %vm320, %v294, %v313
      %v322 = vsel %vm320, %v284, %v314
      %v323 = vsel %vm320, %v318, %v315
      %v324 = vsub.f32 %v298, %v299
      %v325 = vmul.f32 %v324, 1.442695
      %v326 = vpow.pop %v325
      %v327 = vadd.f32 %v319, %v326
      %vm328 = vcmp.eq.s32.totalorder %v286, 3
      %v329 = vsel %vm328, %v298, %v321
      %v330 = vsel %vm328, %v285, %v322
      %v331 = vsel %vm328, %v326, %v323
      %v332 = vsub.f32 %v329, %v299
      %v333 = vlog2.pop %v327
      %v334 = vmul.f32 %v333, 0.6931472
      %v335 = vsub.f32 %v332, %v334
      %v336 = vrcp.pop %v327
      %v337 = vmul.f32 %v331, %v336
      %v338 = vadd.f32 %v337, 1.0
      %v339 = vmul.f32 %v338, %v338
      %v340 = vsub.f32 0.0, %v330
      %v341 = vmul.f32 %v340, %v339
      %v342 = vmul.f32 %v341, %v335
      %v343 = vld [vmem:[%s276] sm:$0xff]
      %v344 = vadd.f32 %v343, %v342
      %345 = vst [vmem:[%s276] sm:$0xff] %v344
      %p346 = scmp.lt.s32.totalorder %s19, 1
      %s347 = scalar_select %p346, %s19, 1
      %p348 = scmp.lt.s32.totalorder %s20, 0
      %s349 = scalar_select %p348, %s20, 0
      %s350 = sadd.s32 %s349, %s347
      %s351 = smul.addr %s350, 8
      %s352 = scalar_lea.vmem %s3, %s351
      // Predicated region
      $region37: #{focal_loss.1} parent=31 // pred_check
        %p353 = pneg %p142
      $region38: #{focal_loss.1} parent=31 // pred_check_branch
        %355 = sbr.rel (%p353) target = $region40
      $region39: #{focal_loss.1} parent=31 // pred_region
        _
      $region40: #{focal_loss.1} parent=31 // pred_fallthru
        _
    $region32: #{focal_loss.1} parent=5 // pred_fallthru
      _
    %p356 = scmp.le.s32.totalorder 2, %s9
    // Predicated region
    $region41: #{focal_loss.1} parent=5 // pred_check
      %p357 = pneg %p356
    $region42: #{focal_loss.1} parent=5 // pred_check_branch
      %359 = sbr.rel (%p357) target = $region44
    $region43: #{focal_loss.1} parent=5 // pred_region
      %s360 = ssub.s32 %s9, 2
      // Predicated region
      $region45: #{focal_loss.1} parent=43 // pred_check
        %p361 = pneg %p148
      $region46: #{focal_loss.1} parent=43 // pred_check_branch
        %363 = sbr.rel (%p361) target = $region48
      $region47: #{focal_loss.1} parent=43 // pred_region
        %p364 = scmp.lt.s32.totalorder %s22, 1
        %s365 = scalar_select %p364, %s22, 1
        %p366 = scmp.lt.s32.totalorder %s23, 0
        %s367 = scalar_select %p366, %s23, 0
        %s368 = sadd.s32 %s367, %s365
        %s369 = smul.addr %s368, 8
        %s370 = scalar_lea.vmem %s3, %s369
      $region48: #{focal_loss.1} parent=43 // pred_fallthru
        _
    $region44: #{focal_loss.1} parent=5 // pred_fallthru
      _
  $region6: #{focal_loss.1} parent=0 // loop_footer
    %s13 = sadd.s32 1, %s9
  $region7: #{focal_loss.1} parent=0 // loop_footer_branch
    %8 = sbr.rel target = $region3
  $region8: #{focal_loss.1} parent=0 // loop_exit
    _

</llo_original>
